<compile_context>
chip_gen: v6e
topology: v6e:2x2x1
jax: 0.10.0
libtpu: 0.0.40
codegen_flags: <defaults>
</compile_context>

<pallas_src>
import jax
import jax.numpy as jnp
import numpy as np
from jax.experimental import pallas as pl
from jax.experimental.pallas import tpu as pltpu  # noqa: F401  (kept for future scratch / compiler params)

INPUT_STR = 'apxlea'
LABEL_STR = '1'
CHAR_VOCAB = sorted(list(set(INPUT_STR + LABEL_STR)))
VOCAB_SIZE = len(CHAR_VOCAB)       # 6
INPUT_SIZE = VOCAB_SIZE            # 6
HIDDEN_SIZE = 8
OUTPUT_SIZE = VOCAB_SIZE           # 6

# ---- packed-parameter slab layout: one (32, 128) f32 block -----------------
_ROW_WIH = 0     # rows  0..7 : W_ih (I, H)  at [0:I,        0:H]
_ROW_WHH = 8     # rows  8..15: W_hh (H, H)  at [8:8+H,      0:H]
_ROW_B   = 16    # row   16   : b_ih + b_hh  at [16,         0:H]
_ROW_BFC = 17    # row   17   : b_fc         at [17,         0:O]  (zeros beyond O)
_ROW_WFC = 24    # rows 24..31: W_fc (H, O)  at [24:24+H,    0:O]  (zeros beyond O)
_SLAB_ROWS = 32
_LANES = 128


def _pairwise_sum(terms):
    """Balanced binary-tree sum: minimizes dependent-add depth on the VALU."""
    while len(terms) > 1:
        nxt = [terms[i] + terms[i + 1] for i in range(0, len(terms) - 1, 2)]
        if len(terms) % 2:
            nxt.append(terms[-1])
        terms = nxt
    return terms[0]


def pack_params(params):
    """Pack all tiny weights/biases into one (8,128)-aligned f32 slab.

    One slab == one kernel operand == one DMA descriptor (instead of five).
    In a real model this would be packed once and reused across calls.
    """
    I, H = params['w_ih'].shape
    O = params['w_fc'].shape[1]
    slab = jnp.zeros((_SLAB_ROWS, _LANES), jnp.float32)
    slab = slab.at[_ROW_WIH:_ROW_WIH + I, 0:H].set(params['w_ih'])
    slab = slab.at[_ROW_WHH:_ROW_WHH + H, 0:H].set(params['w_hh'])
    slab = slab.at[_ROW_B, 0:H].set(params['b_ih'] + params['b_hh'])
    slab = slab.at[_ROW_BFC, 0:O].set(params['b_fc'])
    slab = slab.at[_ROW_WFC:_ROW_WFC + H, 0:O].set(params['w_fc'])
    return slab


def rnn_forward(x, params):
    """x: (B, T, I) float32 -> (B, 1, O) float32 (matches the PyTorch forward)."""
    B, T, I = x.shape
    H = params['w_hh'].shape[0]
    O = params['w_fc'].shape[1]
    Bp = ((B + 7) // 8) * 8            # batch padded to the f32 sublane tile

    slab = pack_params(params)

    # Time-major slab with batch padded to Bp (row index = t*Bp + b).  The
    # transpose+pad+reshape fuse into one tiny XLA layout copy; if B*T*I ever
    # scales, move this shuffle in-kernel (pltpu.einshape) off the HBM path.
    x_tm = jnp.transpose(x, (1, 0, 2))                     # (T, B, I)
    x_tm = jnp.pad(x_tm, ((0, 0), (0, Bp - B), (0, 0)))    # (T, Bp, I)
    x2d = x_tm.reshape(T * Bp, I)                          # (T*Bp, I)

    def kernel(x_ref, p_ref, out_ref):
        # Single load of the packed slab (4 vregs), then static value slices.
        P = p_ref[...]                                     # (32, 128)
        w_ih = P[_ROW_WIH:_ROW_WIH + I, 0:H]               # (I, H)
        w_hh = P[_ROW_WHH:_ROW_WHH + H, 0:H]               # (H, H)
        b    = P[_ROW_B:_ROW_B + 1, 0:H]                   # (1, H)   b_ih + b_hh
        w_fc = P[_ROW_WFC:_ROW_WFC + H, :]                 # (H, 128) zero-padded lanes
        b_fc = P[_ROW_BFC:_ROW_BFC + 1, :]                 # (1, 128) zero-padded lanes

        # Hoisted input projection for ALL timesteps in one MXU op, bias folded
        # in once: (T*Bp, I) @ (I, H) -> (T*Bp, H).
        pre = jnp.dot(x_ref[...], w_ih,
                      preferred_element_type=jnp.float32) + b

        h = jnp.zeros((Bp, H), jnp.float32)                # carried in vregs

        # Fully unrolled recurrence (T static).  Only h @ W_hh sits on the
        # serial path: 8 independent broadcast products, balanced tree sum
        # (1 mul + 4 dependent adds + tanh per step).  On v7x, a per-step
        # jnp.dot(h, w_hh) via the MRB may win — re-benchmark there.
        for t in range(T):
            x_t = pre[t * Bp:(t + 1) * Bp, :]              # aligned whole-vreg slice
            parts = [h[:, k:k + 1] * w_hh[k:k + 1, :] for k in range(H)]
            h = jnp.tanh(x_t + _pairwise_sum(parts))

        # Final Linear on the last hidden state; (Bp, 128) lane-dense store.
        out_ref[...] = (jnp.dot(h, w_fc,
                                preferred_element_type=jnp.float32) + b_fc)

    out_padded = pl.pallas_call(
        kernel,
        out_shape=jax.ShapeDtypeStruct((Bp, _LANES), jnp.float32),
        in_specs=[
            pl.BlockSpec((T * Bp, I), lambda: (0, 0)),
            pl.BlockSpec((_SLAB_ROWS, _LANES), lambda: (0, 0)),
        ],
        out_specs=pl.BlockSpec((Bp, _LANES), lambda: (0, 0)),
    )(x2d, slab)

    return out_padded[:B, :O].reshape(B, 1, O)


def init_params(key, input_size, hidden_size, output_size):
    """Deterministic init mirroring PyTorch's default uniform(-1/sqrt(H), 1/sqrt(H))."""
    ks = jax.random.split(key, 8)
    k_rnn = 1.0 / np.sqrt(hidden_size)
    k_fc = 1.0 / np.sqrt(hidden_size)
    u = lambda k, shape, bound: jax.random.uniform(
        k, shape, jnp.float32, minval=-bound, maxval=bound)
    return {
        # stored already transposed vs. PyTorch convention: kernel computes h @ W
        'w_ih': u(ks[0], (input_size, hidden_size), k_rnn),
        'w_hh': u(ks[1], (hidden_size, hidden_size), k_rnn),
        'b_ih': u(ks[2], (hidden_size,), k_rnn),
        'b_hh': u(ks[3], (hidden_size,), k_rnn),
        'w_fc': u(ks[4], (hidden_size, output_size), k_fc),
        'b_fc': u(ks[5], (output_size,), k_fc),
    }


def rnn_forward_ref(x, params):
    """Pure-JAX reference of the PyTorch forward, for a correctness check."""
    B, T, I = x.shape
    H = params['w_hh'].shape[0]
    h = jnp.zeros((B, H), jnp.float32)
    b = params['b_ih'] + params['b_hh']
    for t in range(T):
        h = jnp.tanh(x[:, t, :] @ params['w_ih'] + h @ params['w_hh'] + b)
    out = h @ params['w_fc'] + params['b_fc']
    return out[:, None, :]


if __name__ == "__main__":
    key = jax.random.PRNGKey(0)
    k_x, k_p = jax.random.split(key)

    B, T = 2, len(INPUT_STR)          # batch=2, seq=6 (length of 'apxlea')
    x = jax.random.normal(k_x, (B, T, INPUT_SIZE), dtype=jnp.float32)

    params = init_params(k_p, INPUT_SIZE, HIDDEN_SIZE, OUTPUT_SIZE)

    out = rnn_forward(x, params)
    out = jax.block_until_ready(out)

    ref = rnn_forward_ref(x, params)
    np.testing.assert_allclose(np.asarray(out), np.asarray(ref),
                               rtol=1e-3, atol=1e-4)
    assert out.shape == (B, 1, OUTPUT_SIZE)

    print("KERNEL_OK")
</pallas_src>

<mosaic_0001>
module attributes {stable_mosaic.version = 11 : i64} {
  func.func @kernel(%arg0: memref<48x6xf32, #tpu.memory_space<vmem>>, %arg1: memref<32x128xf32, #tpu.memory_space<vmem>>, %arg2: memref<8x128xf32, #tpu.memory_space<vmem>>) attributes {dimension_semantics = [], scalar_prefetch = 0 : i64, scratch_operands = 0 : i64, tpu.core_type = #tpu.core_type<tc>} {
    %c0 = arith.constant 0 : index
    %c0_0 = arith.constant 0 : index
    %0 = vector.load %arg1[%c0, %c0_0] : memref<32x128xf32, #tpu.memory_space<vmem>>, vector<32x128xf32>
    %1 = vector.extract_strided_slice %0 {offsets = [0, 0], sizes = [6, 8], strides = [1, 1]} : vector<32x128xf32> to vector<6x8xf32>
    %2 = vector.extract_strided_slice %0 {offsets = [8, 0], sizes = [8, 8], strides = [1, 1]} : vector<32x128xf32> to vector<8x8xf32>
    %3 = vector.extract_strided_slice %0 {offsets = [16, 0], sizes = [1, 8], strides = [1, 1]} : vector<32x128xf32> to vector<1x8xf32>
    %4 = vector.extract_strided_slice %0 {offsets = [24, 0], sizes = [8, 128], strides = [1, 1]} : vector<32x128xf32> to vector<8x128xf32>
    %5 = vector.extract_strided_slice %0 {offsets = [17, 0], sizes = [1, 128], strides = [1, 1]} : vector<32x128xf32> to vector<1x128xf32>
    %c0_1 = arith.constant 0 : index
    %c0_2 = arith.constant 0 : index
    %6 = vector.load %arg0[%c0_1, %c0_2] : memref<48x6xf32, #tpu.memory_space<vmem>>, vector<48x6xf32>
    %cst = arith.constant dense<0.000000e+00> : vector<48x8xf32>
    %7 = tpu.matmul %6, %1, %cst {dimension_numbers = #tpu.dot_dimension_numbers<[1], [0], [0], [1], [0, 0, 1, 1], [], []>} : vector<48x6xf32>, vector<6x8xf32>, vector<48x8xf32> -> vector<48x8xf32>
    %8 = vector.broadcast %3 : vector<1x8xf32> to vector<48x8xf32>
    %9 = arith.addf %7, %8 : vector<48x8xf32>
    %cst_3 = arith.constant 0.000000e+00 : f32
    %10 = vector.broadcast %cst_3 : f32 to vector<8x8xf32>
    %11 = vector.extract_strided_slice %9 {offsets = [0, 0], sizes = [8, 8], strides = [1, 1]} : vector<48x8xf32> to vector<8x8xf32>
    %12 = vector.extract_strided_slice %10 {offsets = [0, 0], sizes = [8, 1], strides = [1, 1]} : vector<8x8xf32> to vector<8x1xf32>
    %13 = vector.extract_strided_slice %2 {offsets = [0, 0], sizes = [1, 8], strides = [1, 1]} : vector<8x8xf32> to vector<1x8xf32>
    %14 = vector.broadcast %12 : vector<8x1xf32> to vector<8x8xf32>
    %15 = vector.broadcast %13 : vector<1x8xf32> to vector<8x8xf32>
    %16 = arith.mulf %14, %15 : vector<8x8xf32>
    %17 = vector.extract_strided_slice %10 {offsets = [0, 1], sizes = [8, 1], strides = [1, 1]} : vector<8x8xf32> to vector<8x1xf32>
    %18 = vector.extract_strided_slice %2 {offsets = [1, 0], sizes = [1, 8], strides = [1, 1]} : vector<8x8xf32> to vector<1x8xf32>
    %19 = vector.broadcast %17 : vector<8x1xf32> to vector<8x8xf32>
    %20 = vector.broadcast %18 : vector<1x8xf32> to vector<8x8xf32>
    %21 = arith.mulf %19, %20 : vector<8x8xf32>
    %22 = vector.extract_strided_slice %10 {offsets = [0, 2], sizes = [8, 1], strides = [1, 1]} : vector<8x8xf32> to vector<8x1xf32>
    %23 = vector.extract_strided_slice %2 {offsets = [2, 0], sizes = [1, 8], strides = [1, 1]} : vector<8x8xf32> to vector<1x8xf32>
    %24 = vector.broadcast %22 : vector<8x1xf32> to vector<8x8xf32>
    %25 = vector.broadcast %23 : vector<1x8xf32> to vector<8x8xf32>
    %26 = arith.mulf %24, %25 : vector<8x8xf32>
    %27 = vector.extract_strided_slice %10 {offsets = [0, 3], sizes = [8, 1], strides = [1, 1]} : vector<8x8xf32> to vector<8x1xf32>
    %28 = vector.extract_strided_slice %2 {offsets = [3, 0], sizes = [1, 8], strides = [1, 1]} : vector<8x8xf32> to vector<1x8xf32>
    %29 = vector.broadcast %27 : vector<8x1xf32> to vector<8x8xf32>
    %30 = vector.broadcast %28 : vector<1x8xf32> to vector<8x8xf32>
    %31 = arith.mulf %29, %30 : vector<8x8xf32>
    %32 = vector.extract_strided_slice %10 {offsets = [0, 4], sizes = [8, 1], strides = [1, 1]} : vector<8x8xf32> to vector<8x1xf32>
    %33 = vector.extract_strided_slice %2 {offsets = [4, 0], sizes = [1, 8], strides = [1, 1]} : vector<8x8xf32> to vector<1x8xf32>
    %34 = vector.broadcast %32 : vector<8x1xf32> to vector<8x8xf32>
    %35 = vector.broadcast %33 : vector<1x8xf32> to vector<8x8xf32>
    %36 = arith.mulf %34, %35 : vector<8x8xf32>
    %37 = vector.extract_strided_slice %10 {offsets = [0, 5], sizes = [8, 1], strides = [1, 1]} : vector<8x8xf32> to vector<8x1xf32>
    %38 = vector.extract_strided_slice %2 {offsets = [5, 0], sizes = [1, 8], strides = [1, 1]} : vector<8x8xf32> to vector<1x8xf32>
    %39 = vector.broadcast %37 : vector<8x1xf32> to vector<8x8xf32>
    %40 = vector.broadcast %38 : vector<1x8xf32> to vector<8x8xf32>
    %41 = arith.mulf %39, %40 : vector<8x8xf32>
    %42 = vector.extract_strided_slice %10 {offsets = [0, 6], sizes = [8, 1], strides = [1, 1]} : vector<8x8xf32> to vector<8x1xf32>
    %43 = vector.extract_strided_slice %2 {offsets = [6, 0], sizes = [1, 8], strides = [1, 1]} : vector<8x8xf32> to vector<1x8xf32>
    %44 = vector.broadcast %42 : vector<8x1xf32> to vector<8x8xf32>
    %45 = vector.broadcast %43 : vector<1x8xf32> to vector<8x8xf32>
    %46 = arith.mulf %44, %45 : vector<8x8xf32>
    %47 = vector.extract_strided_slice %10 {offsets = [0, 7], sizes = [8, 1], strides = [1, 1]} : vector<8x8xf32> to vector<8x1xf32>
    %48 = vector.extract_strided_slice %2 {offsets = [7, 0], sizes = [1, 8], strides = [1, 1]} : vector<8x8xf32> to vector<1x8xf32>
    %49 = vector.broadcast %47 : vector<8x1xf32> to vector<8x8xf32>
    %50 = vector.broadcast %48 : vector<1x8xf32> to vector<8x8xf32>
    %51 = arith.mulf %49, %50 : vector<8x8xf32>
    %52 = arith.addf %16, %21 : vector<8x8xf32>
    %53 = arith.addf %26, %31 : vector<8x8xf32>
    %54 = arith.addf %36, %41 : vector<8x8xf32>
    %55 = arith.addf %46, %51 : vector<8x8xf32>
    %56 = arith.addf %52, %53 : vector<8x8xf32>
    %57 = arith.addf %54, %55 : vector<8x8xf32>
    %58 = arith.addf %56, %57 : vector<8x8xf32>
    %59 = arith.addf %11, %58 : vector<8x8xf32>
    %60 = math.tanh %59 : vector<8x8xf32>
    %61 = vector.extract_strided_slice %9 {offsets = [8, 0], sizes = [8, 8], strides = [1, 1]} : vector<48x8xf32> to vector<8x8xf32>
    %62 = vector.extract_strided_slice %60 {offsets = [0, 0], sizes = [8, 1], strides = [1, 1]} : vector<8x8xf32> to vector<8x1xf32>
    %63 = vector.extract_strided_slice %2 {offsets = [0, 0], sizes = [1, 8], strides = [1, 1]} : vector<8x8xf32> to vector<1x8xf32>
    %64 = vector.broadcast %62 : vector<8x1xf32> to vector<8x8xf32>
    %65 = vector.broadcast %63 : vector<1x8xf32> to vector<8x8xf32>
    %66 = arith.mulf %64, %65 : vector<8x8xf32>
    %67 = vector.extract_strided_slice %60 {offsets = [0, 1], sizes = [8, 1], strides = [1, 1]} : vector<8x8xf32> to vector<8x1xf32>
    %68 = vector.extract_strided_slice %2 {offsets = [1, 0], sizes = [1, 8], strides = [1, 1]} : vector<8x8xf32> to vector<1x8xf32>
    %69 = vector.broadcast %67 : vector<8x1xf32> to vector<8x8xf32>
    %70 = vector.broadcast %68 : vector<1x8xf32> to vector<8x8xf32>
    %71 = arith.mulf %69, %70 : vector<8x8xf32>
    %72 = vector.extract_strided_slice %60 {offsets = [0, 2], sizes = [8, 1], strides = [1, 1]} : vector<8x8xf32> to vector<8x1xf32>
    %73 = vector.extract_strided_slice %2 {offsets = [2, 0], sizes = [1, 8], strides = [1, 1]} : vector<8x8xf32> to vector<1x8xf32>
    %74 = vector.broadcast %72 : vector<8x1xf32> to vector<8x8xf32>
    %75 = vector.broadcast %73 : vector<1x8xf32> to vector<8x8xf32>
    %76 = arith.mulf %74, %75 : vector<8x8xf32>
    %77 = vector.extract_strided_slice %60 {offsets = [0, 3], sizes = [8, 1], strides = [1, 1]} : vector<8x8xf32> to vector<8x1xf32>
    %78 = vector.extract_strided_slice %2 {offsets = [3, 0], sizes = [1, 8], strides = [1, 1]} : vector<8x8xf32> to vector<1x8xf32>
    %79 = vector.broadcast %77 : vector<8x1xf32> to vector<8x8xf32>
    %80 = vector.broadcast %78 : vector<1x8xf32> to vector<8x8xf32>
    %81 = arith.mulf %79, %80 : vector<8x8xf32>
    %82 = vector.extract_strided_slice %60 {offsets = [0, 4], sizes = [8, 1], strides = [1, 1]} : vector<8x8xf32> to vector<8x1xf32>
    %83 = vector.extract_strided_slice %2 {offsets = [4, 0], sizes = [1, 8], strides = [1, 1]} : vector<8x8xf32> to vector<1x8xf32>
    %84 = vector.broadcast %82 : vector<8x1xf32> to vector<8x8xf32>
    %85 = vector.broadcast %83 : vector<1x8xf32> to vector<8x8xf32>
    %86 = arith.mulf %84, %85 : vector<8x8xf32>
    %87 = vector.extract_strided_slice %60 {offsets = [0, 5], sizes = [8, 1], strides = [1, 1]} : vector<8x8xf32> to vector<8x1xf32>
    %88 = vector.extract_strided_slice %2 {offsets = [5, 0], sizes = [1, 8], strides = [1, 1]} : vector<8x8xf32> to vector<1x8xf32>
    %89 = vector.broadcast %87 : vector<8x1xf32> to vector<8x8xf32>
    %90 = vector.broadcast %88 : vector<1x8xf32> to vector<8x8xf32>
    %91 = arith.mulf %89, %90 : vector<8x8xf32>
    %92 = vector.extract_strided_slice %60 {offsets = [0, 6], sizes = [8, 1], strides = [1, 1]} : vector<8x8xf32> to vector<8x1xf32>
    %93 = vector.extract_strided_slice %2 {offsets = [6, 0], sizes = [1, 8], strides = [1, 1]} : vector<8x8xf32> to vector<1x8xf32>
    %94 = vector.broadcast %92 : vector<8x1xf32> to vector<8x8xf32>
    %95 = vector.broadcast %93 : vector<1x8xf32> to vector<8x8xf32>
    %96 = arith.mulf %94, %95 : vector<8x8xf32>
    %97 = vector.extract_strided_slice %60 {offsets = [0, 7], sizes = [8, 1], strides = [1, 1]} : vector<8x8xf32> to vector<8x1xf32>
    %98 = vector.extract_strided_slice %2 {offsets = [7, 0], sizes = [1, 8], strides = [1, 1]} : vector<8x8xf32> to vector<1x8xf32>
    %99 = vector.broadcast %97 : vector<8x1xf32> to vector<8x8xf32>
    %100 = vector.broadcast %98 : vector<1x8xf32> to vector<8x8xf32>
    %101 = arith.mulf %99, %100 : vector<8x8xf32>
    %102 = arith.addf %66, %71 : vector<8x8xf32>
    %103 = arith.addf %76, %81 : vector<8x8xf32>
    %104 = arith.addf %86, %91 : vector<8x8xf32>
    %105 = arith.addf %96, %101 : vector<8x8xf32>
    %106 = arith.addf %102, %103 : vector<8x8xf32>
    %107 = arith.addf %104, %105 : vector<8x8xf32>
    %108 = arith.addf %106, %107 : vector<8x8xf32>
    %109 = arith.addf %61, %108 : vector<8x8xf32>
    %110 = math.tanh %109 : vector<8x8xf32>
    %111 = vector.extract_strided_slice %9 {offsets = [16, 0], sizes = [8, 8], strides = [1, 1]} : vector<48x8xf32> to vector<8x8xf32>
    %112 = vector.extract_strided_slice %110 {offsets = [0, 0], sizes = [8, 1], strides = [1, 1]} : vector<8x8xf32> to vector<8x1xf32>
    %113 = vector.extract_strided_slice %2 {offsets = [0, 0], sizes = [1, 8], strides = [1, 1]} : vector<8x8xf32> to vector<1x8xf32>
    %114 = vector.broadcast %112 : vector<8x1xf32> to vector<8x8xf32>
    %115 = vector.broadcast %113 : vector<1x8xf32> to vector<8x8xf32>
    %116 = arith.mulf %114, %115 : vector<8x8xf32>
    %117 = vector.extract_strided_slice %110 {offsets = [0, 1], sizes = [8, 1], strides = [1, 1]} : vector<8x8xf32> to vector<8x1xf32>
    %118 = vector.extract_strided_slice %2 {offsets = [1, 0], sizes = [1, 8], strides = [1, 1]} : vector<8x8xf32> to vector<1x8xf32>
    %119 = vector.broadcast %117 : vector<8x1xf32> to vector<8x8xf32>
    %120 = vector.broadcast %118 : vector<1x8xf32> to vector<8x8xf32>
    %121 = arith.mulf %119, %120 : vector<8x8xf32>
    %122 = vector.extract_strided_slice %110 {offsets = [0, 2], sizes = [8, 1], strides = [1, 1]} : vector<8x8xf32> to vector<8x1xf32>
    %123 = vector.extract_strided_slice %2 {offsets = [2, 0], sizes = [1, 8], strides = [1, 1]} : vector<8x8xf32> to vector<1x8xf32>
    %124 = vector.broadcast %122 : vector<8x1xf32> to vector<8x8xf32>
    %125 = vector.broadcast %123 : vector<1x8xf32> to vector<8x8xf32>
    %126 = arith.mulf %124, %125 : vector<8x8xf32>
    %127 = vector.extract_strided_slice %110 {offsets = [0, 3], sizes = [8, 1], strides = [1, 1]} : vector<8x8xf32> to vector<8x1xf32>
    %128 = vector.extract_strided_slice %2 {offsets = [3, 0], sizes = [1, 8], strides = [1, 1]} : vector<8x8xf32> to vector<1x8xf32>
    %129 = vector.broadcast %127 : vector<8x1xf32> to vector<8x8xf32>
    %130 = vector.broadcast %128 : vector<1x8xf32> to vector<8x8xf32>
    %131 = arith.mulf %129, %130 : vector<8x8xf32>
    %132 = vector.extract_strided_slice %110 {offsets = [0, 4], sizes = [8, 1], strides = [1, 1]} : vector<8x8xf32> to vector<8x1xf32>
    %133 = vector.extract_strided_slice %2 {offsets = [4, 0], sizes = [1, 8], strides = [1, 1]} : vector<8x8xf32> to vector<1x8xf32>
    %134 = vector.broadcast %132 : vector<8x1xf32> to vector<8x8xf32>
    %135 = vector.broadcast %133 : vector<1x8xf32> to vector<8x8xf32>
    %136 = arith.mulf %134, %135 : vector<8x8xf32>
    %137 = vector.extract_strided_slice %110 {offsets = [0, 5], sizes = [8, 1], strides = [1, 1]} : vector<8x8xf32> to vector<8x1xf32>
    %138 = vector.extract_strided_slice %2 {offsets = [5, 0], sizes = [1, 8], strides = [1, 1]} : vector<8x8xf32> to vector<1x8xf32>
    %139 = vector.broadcast %137 : vector<8x1xf32> to vector<8x8xf32>
    %140 = vector.broadcast %138 : vector<1x8xf32> to vector<8x8xf32>
    %141 = arith.mulf %139, %140 : vector<8x8xf32>
    %142 = vector.extract_strided_slice %110 {offsets = [0, 6], sizes = [8, 1], strides = [1, 1]} : vector<8x8xf32> to vector<8x1xf32>
    %143 = vector.extract_strided_slice %2 {offsets = [6, 0], sizes = [1, 8], strides = [1, 1]} : vector<8x8xf32> to vector<1x8xf32>
    %144 = vector.broadcast %142 : vector<8x1xf32> to vector<8x8xf32>
    %145 = vector.broadcast %143 : vector<1x8xf32> to vector<8x8xf32>
    %146 = arith.mulf %144, %145 : vector<8x8xf32>
    %147 = vector.extract_strided_slice %110 {offsets = [0, 7], sizes = [8, 1], strides = [1, 1]} : vector<8x8xf32> to vector<8x1xf32>
    %148 = vector.extract_strided_slice %2 {offsets = [7, 0], sizes = [1, 8], strides = [1, 1]} : vector<8x8xf32> to vector<1x8xf32>
    %149 = vector.broadcast %147 : vector<8x1xf32> to vector<8x8xf32>
    %150 = vector.broadcast %148 : vector<1x8xf32> to vector<8x8xf32>
    %151 = arith.mulf %149, %150 : vector<8x8xf32>
    %152 = arith.addf %116, %121 : vector<8x8xf32>
    %153 = arith.addf %126, %131 : vector<8x8xf32>
    %154 = arith.addf %136, %141 : vector<8x8xf32>
    %155 = arith.addf %146, %151 : vector<8x8xf32>
    %156 = arith.addf %152, %153 : vector<8x8xf32>
    %157 = arith.addf %154, %155 : vector<8x8xf32>
    %158 = arith.addf %156, %157 : vector<8x8xf32>
    %159 = arith.addf %111, %158 : vector<8x8xf32>
    %160 = math.tanh %159 : vector<8x8xf32>
    %161 = vector.extract_strided_slice %9 {offsets = [24, 0], sizes = [8, 8], strides = [1, 1]} : vector<48x8xf32> to vector<8x8xf32>
    %162 = vector.extract_strided_slice %160 {offsets = [0, 0], sizes = [8, 1], strides = [1, 1]} : vector<8x8xf32> to vector<8x1xf32>
    %163 = vector.extract_strided_slice %2 {offsets = [0, 0], sizes = [1, 8], strides = [1, 1]} : vector<8x8xf32> to vector<1x8xf32>
    %164 = vector.broadcast %162 : vector<8x1xf32> to vector<8x8xf32>
    %165 = vector.broadcast %163 : vector<1x8xf32> to vector<8x8xf32>
    %166 = arith.mulf %164, %165 : vector<8x8xf32>
    %167 = vector.extract_strided_slice %160 {offsets = [0, 1], sizes = [8, 1], strides = [1, 1]} : vector<8x8xf32> to vector<8x1xf32>
    %168 = vector.extract_strided_slice %2 {offsets = [1, 0], sizes = [1, 8], strides = [1, 1]} : vector<8x8xf32> to vector<1x8xf32>
    %169 = vector.broadcast %167 : vector<8x1xf32> to vector<8x8xf32>
    %170 = vector.broadcast %168 : vector<1x8xf32> to vector<8x8xf32>
    %171 = arith.mulf %169, %170 : vector<8x8xf32>
    %172 = vector.extract_strided_slice %160 {offsets = [0, 2], sizes = [8, 1], strides = [1, 1]} : vector<8x8xf32> to vector<8x1xf32>
    %173 = vector.extract_strided_slice %2 {offsets = [2, 0], sizes = [1, 8], strides = [1, 1]} : vector<8x8xf32> to vector<1x8xf32>
    %174 = vector.broadcast %172 : vector<8x1xf32> to vector<8x8xf32>
    %175 = vector.broadcast %173 : vector<1x8xf32> to vector<8x8xf32>
    %176 = arith.mulf %174, %175 : vector<8x8xf32>
    %177 = vector.extract_strided_slice %160 {offsets = [0, 3], sizes = [8, 1], strides = [1, 1]} : vector<8x8xf32> to vector<8x1xf32>
    %178 = vector.extract_strided_slice %2 {offsets = [3, 0], sizes = [1, 8], strides = [1, 1]} : vector<8x8xf32> to vector<1x8xf32>
    %179 = vector.broadcast %177 : vector<8x1xf32> to vector<8x8xf32>
    %180 = vector.broadcast %178 : vector<1x8xf32> to vector<8x8xf32>
    %181 = arith.mulf %179, %180 : vector<8x8xf32>
    %182 = vector.extract_strided_slice %160 {offsets = [0, 4], sizes = [8, 1], strides = [1, 1]} : vector<8x8xf32> to vector<8x1xf32>
    %183 = vector.extract_strided_slice %2 {offsets = [4, 0], sizes = [1, 8], strides = [1, 1]} : vector<8x8xf32> to vector<1x8xf32>
    %184 = vector.broadcast %182 : vector<8x1xf32> to vector<8x8xf32>
    %185 = vector.broadcast %183 : vector<1x8xf32> to vector<8x8xf32>
    %186 = arith.mulf %184, %185 : vector<8x8xf32>
    %187 = vector.extract_strided_slice %160 {offsets = [0, 5], sizes = [8, 1], strides = [1, 1]} : vector<8x8xf32> to vector<8x1xf32>
    %188 = vector.extract_strided_slice %2 {offsets = [5, 0], sizes = [1, 8], strides = [1, 1]} : vector<8x8xf32> to vector<1x8xf32>
    %189 = vector.broadcast %187 : vector<8x1xf32> to vector<8x8xf32>
    %190 = vector.broadcast %188 : vector<1x8xf32> to vector<8x8xf32>
    %191 = arith.mulf %189, %190 : vector<8x8xf32>
    %192 = vector.extract_strided_slice %160 {offsets = [0, 6], sizes = [8, 1], strides = [1, 1]} : vector<8x8xf32> to vector<8x1xf32>
    %193 = vector.extract_strided_slice %2 {offsets = [6, 0], sizes = [1, 8], strides = [1, 1]} : vector<8x8xf32> to vector<1x8xf32>
    %194 = vector.broadcast %192 : vector<8x1xf32> to vector<8x8xf32>
    %195 = vector.broadcast %193 : vector<1x8xf32> to vector<8x8xf32>
    %196 = arith.mulf %194, %195 : vector<8x8xf32>
    %197 = vector.extract_strided_slice %160 {offsets = [0, 7], sizes = [8, 1], strides = [1, 1]} : vector<8x8xf32> to vector<8x1xf32>
    %198 = vector.extract_strided_slice %2 {offsets = [7, 0], sizes = [1, 8], strides = [1, 1]} : vector<8x8xf32> to vector<1x8xf32>
    %199 = vector.broadcast %197 : vector<8x1xf32> to vector<8x8xf32>
    %200 = vector.broadcast %198 : vector<1x8xf32> to vector<8x8xf32>
    %201 = arith.mulf %199, %200 : vector<8x8xf32>
    %202 = arith.addf %166, %171 : vector<8x8xf32>
    %203 = arith.addf %176, %181 : vector<8x8xf32>
    %204 = arith.addf %186, %191 : vector<8x8xf32>
    %205 = arith.addf %196, %201 : vector<8x8xf32>
    %206 = arith.addf %202, %203 : vector<8x8xf32>
    %207 = arith.addf %204, %205 : vector<8x8xf32>
    %208 = arith.addf %206, %207 : vector<8x8xf32>
    %209 = arith.addf %161, %208 : vector<8x8xf32>
    %210 = math.tanh %209 : vector<8x8xf32>
    %211 = vector.extract_strided_slice %9 {offsets = [32, 0], sizes = [8, 8], strides = [1, 1]} : vector<48x8xf32> to vector<8x8xf32>
    %212 = vector.extract_strided_slice %210 {offsets = [0, 0], sizes = [8, 1], strides = [1, 1]} : vector<8x8xf32> to vector<8x1xf32>
    %213 = vector.extract_strided_slice %2 {offsets = [0, 0], sizes = [1, 8], strides = [1, 1]} : vector<8x8xf32> to vector<1x8xf32>
    %214 = vector.broadcast %212 : vector<8x1xf32> to vector<8x8xf32>
    %215 = vector.broadcast %213 : vector<1x8xf32> to vector<8x8xf32>
    %216 = arith.mulf %214, %215 : vector<8x8xf32>
    %217 = vector.extract_strided_slice %210 {offsets = [0, 1], sizes = [8, 1], strides = [1, 1]} : vector<8x8xf32> to vector<8x1xf32>
    %218 = vector.extract_strided_slice %2 {offsets = [1, 0], sizes = [1, 8], strides = [1, 1]} : vector<8x8xf32> to vector<1x8xf32>
    %219 = vector.broadcast %217 : vector<8x1xf32> to vector<8x8xf32>
    %220 = vector.broadcast %218 : vector<1x8xf32> to vector<8x8xf32>
    %221 = arith.mulf %219, %220 : vector<8x8xf32>
    %222 = vector.extract_strided_slice %210 {offsets = [0, 2], sizes = [8, 1], strides = [1, 1]} : vector<8x8xf32> to vector<8x1xf32>
    %223 = vector.extract_strided_slice %2 {offsets = [2, 0], sizes = [1, 8], strides = [1, 1]} : vector<8x8xf32> to vector<1x8xf32>
    %224 = vector.broadcast %222 : vector<8x1xf32> to vector<8x8xf32>
    %225 = vector.broadcast %223 : vector<1x8xf32> to vector<8x8xf32>
    %226 = arith.mulf %224, %225 : vector<8x8xf32>
    %227 = vector.extract_strided_slice %210 {offsets = [0, 3], sizes = [8, 1], strides = [1, 1]} : vector<8x8xf32> to vector<8x1xf32>
    %228 = vector.extract_strided_slice %2 {offsets = [3, 0], sizes = [1, 8], strides = [1, 1]} : vector<8x8xf32> to vector<1x8xf32>
    %229 = vector.broadcast %227 : vector<8x1xf32> to vector<8x8xf32>
    %230 = vector.broadcast %228 : vector<1x8xf32> to vector<8x8xf32>
    %231 = arith.mulf %229, %230 : vector<8x8xf32>
    %232 = vector.extract_strided_slice %210 {offsets = [0, 4], sizes = [8, 1], strides = [1, 1]} : vector<8x8xf32> to vector<8x1xf32>
    %233 = vector.extract_strided_slice %2 {offsets = [4, 0], sizes = [1, 8], strides = [1, 1]} : vector<8x8xf32> to vector<1x8xf32>
    %234 = vector.broadcast %232 : vector<8x1xf32> to vector<8x8xf32>
    %235 = vector.broadcast %233 : vector<1x8xf32> to vector<8x8xf32>
    %236 = arith.mulf %234, %235 : vector<8x8xf32>
    %237 = vector.extract_strided_slice %210 {offsets = [0, 5], sizes = [8, 1], strides = [1, 1]} : vector<8x8xf32> to vector<8x1xf32>
    %238 = vector.extract_strided_slice %2 {offsets = [5, 0], sizes = [1, 8], strides = [1, 1]} : vector<8x8xf32> to vector<1x8xf32>
    %239 = vector.broadcast %237 : vector<8x1xf32> to vector<8x8xf32>
    %240 = vector.broadcast %238 : vector<1x8xf32> to vector<8x8xf32>
    %241 = arith.mulf %239, %240 : vector<8x8xf32>
    %242 = vector.extract_strided_slice %210 {offsets = [0, 6], sizes = [8, 1], strides = [1, 1]} : vector<8x8xf32> to vector<8x1xf32>
    %243 = vector.extract_strided_slice %2 {offsets = [6, 0], sizes = [1, 8], strides = [1, 1]} : vector<8x8xf32> to vector<1x8xf32>
    %244 = vector.broadcast %242 : vector<8x1xf32> to vector<8x8xf32>
    %245 = vector.broadcast %243 : vector<1x8xf32> to vector<8x8xf32>
    %246 = arith.mulf %244, %245 : vector<8x8xf32>
    %247 = vector.extract_strided_slice %210 {offsets = [0, 7], sizes = [8, 1], strides = [1, 1]} : vector<8x8xf32> to vector<8x1xf32>
    %248 = vector.extract_strided_slice %2 {offsets = [7, 0], sizes = [1, 8], strides = [1, 1]} : vector<8x8xf32> to vector<1x8xf32>
    %249 = vector.broadcast %247 : vector<8x1xf32> to vector<8x8xf32>
    %250 = vector.broadcast %248 : vector<1x8xf32> to vector<8x8xf32>
    %251 = arith.mulf %249, %250 : vector<8x8xf32>
    %252 = arith.addf %216, %221 : vector<8x8xf32>
    %253 = arith.addf %226, %231 : vector<8x8xf32>
    %254 = arith.addf %236, %241 : vector<8x8xf32>
    %255 = arith.addf %246, %251 : vector<8x8xf32>
    %256 = arith.addf %252, %253 : vector<8x8xf32>
    %257 = arith.addf %254, %255 : vector<8x8xf32>
    %258 = arith.addf %256, %257 : vector<8x8xf32>
    %259 = arith.addf %211, %258 : vector<8x8xf32>
    %260 = math.tanh %259 : vector<8x8xf32>
    %261 = vector.extract_strided_slice %9 {offsets = [40, 0], sizes = [8, 8], strides = [1, 1]} : vector<48x8xf32> to vector<8x8xf32>
    %262 = vector.extract_strided_slice %260 {offsets = [0, 0], sizes = [8, 1], strides = [1, 1]} : vector<8x8xf32> to vector<8x1xf32>
    %263 = vector.extract_strided_slice %2 {offsets = [0, 0], sizes = [1, 8], strides = [1, 1]} : vector<8x8xf32> to vector<1x8xf32>
    %264 = vector.broadcast %262 : vector<8x1xf32> to vector<8x8xf32>
    %265 = vector.broadcast %263 : vector<1x8xf32> to vector<8x8xf32>
    %266 = arith.mulf %264, %265 : vector<8x8xf32>
    %267 = vector.extract_strided_slice %260 {offsets = [0, 1], sizes = [8, 1], strides = [1, 1]} : vector<8x8xf32> to vector<8x1xf32>
    %268 = vector.extract_strided_slice %2 {offsets = [1, 0], sizes = [1, 8], strides = [1, 1]} : vector<8x8xf32> to vector<1x8xf32>
    %269 = vector.broadcast %267 : vector<8x1xf32> to vector<8x8xf32>
    %270 = vector.broadcast %268 : vector<1x8xf32> to vector<8x8xf32>
    %271 = arith.mulf %269, %270 : vector<8x8xf32>
    %272 = vector.extract_strided_slice %260 {offsets = [0, 2], sizes = [8, 1], strides = [1, 1]} : vector<8x8xf32> to vector<8x1xf32>
    %273 = vector.extract_strided_slice %2 {offsets = [2, 0], sizes = [1, 8], strides = [1, 1]} : vector<8x8xf32> to vector<1x8xf32>
    %274 = vector.broadcast %272 : vector<8x1xf32> to vector<8x8xf32>
    %275 = vector.broadcast %273 : vector<1x8xf32> to vector<8x8xf32>
    %276 = arith.mulf %274, %275 : vector<8x8xf32>
    %277 = vector.extract_strided_slice %260 {offsets = [0, 3], sizes = [8, 1], strides = [1, 1]} : vector<8x8xf32> to vector<8x1xf32>
    %278 = vector.extract_strided_slice %2 {offsets = [3, 0], sizes = [1, 8], strides = [1, 1]} : vector<8x8xf32> to vector<1x8xf32>
    %279 = vector.broadcast %277 : vector<8x1xf32> to vector<8x8xf32>
    %280 = vector.broadcast %278 : vector<1x8xf32> to vector<8x8xf32>
    %281 = arith.mulf %279, %280 : vector<8x8xf32>
    %282 = vector.extract_strided_slice %260 {offsets = [0, 4], sizes = [8, 1], strides = [1, 1]} : vector<8x8xf32> to vector<8x1xf32>
    %283 = vector.extract_strided_slice %2 {offsets = [4, 0], sizes = [1, 8], strides = [1, 1]} : vector<8x8xf32> to vector<1x8xf32>
    %284 = vector.broadcast %282 : vector<8x1xf32> to vector<8x8xf32>
    %285 = vector.broadcast %283 : vector<1x8xf32> to vector<8x8xf32>
    %286 = arith.mulf %284, %285 : vector<8x8xf32>
    %287 = vector.extract_strided_slice %260 {offsets = [0, 5], sizes = [8, 1], strides = [1, 1]} : vector<8x8xf32> to vector<8x1xf32>
    %288 = vector.extract_strided_slice %2 {offsets = [5, 0], sizes = [1, 8], strides = [1, 1]} : vector<8x8xf32> to vector<1x8xf32>
    %289 = vector.broadcast %287 : vector<8x1xf32> to vector<8x8xf32>
    %290 = vector.broadcast %288 : vector<1x8xf32> to vector<8x8xf32>
    %291 = arith.mulf %289, %290 : vector<8x8xf32>
    %292 = vector.extract_strided_slice %260 {offsets = [0, 6], sizes = [8, 1], strides = [1, 1]} : vector<8x8xf32> to vector<8x1xf32>
    %293 = vector.extract_strided_slice %2 {offsets = [6, 0], sizes = [1, 8], strides = [1, 1]} : vector<8x8xf32> to vector<1x8xf32>
    %294 = vector.broadcast %292 : vector<8x1xf32> to vector<8x8xf32>
    %295 = vector.broadcast %293 : vector<1x8xf32> to vector<8x8xf32>
    %296 = arith.mulf %294, %295 : vector<8x8xf32>
    %297 = vector.extract_strided_slice %260 {offsets = [0, 7], sizes = [8, 1], strides = [1, 1]} : vector<8x8xf32> to vector<8x1xf32>
    %298 = vector.extract_strided_slice %2 {offsets = [7, 0], sizes = [1, 8], strides = [1, 1]} : vector<8x8xf32> to vector<1x8xf32>
    %299 = vector.broadcast %297 : vector<8x1xf32> to vector<8x8xf32>
    %300 = vector.broadcast %298 : vector<1x8xf32> to vector<8x8xf32>
    %301 = arith.mulf %299, %300 : vector<8x8xf32>
    %302 = arith.addf %266, %271 : vector<8x8xf32>
    %303 = arith.addf %276, %281 : vector<8x8xf32>
    %304 = arith.addf %286, %291 : vector<8x8xf32>
    %305 = arith.addf %296, %301 : vector<8x8xf32>
    %306 = arith.addf %302, %303 : vector<8x8xf32>
    %307 = arith.addf %304, %305 : vector<8x8xf32>
    %308 = arith.addf %306, %307 : vector<8x8xf32>
    %309 = arith.addf %261, %308 : vector<8x8xf32>
    %310 = math.tanh %309 : vector<8x8xf32>
    %cst_4 = arith.constant dense<0.000000e+00> : vector<8x128xf32>
    %311 = tpu.matmul %310, %4, %cst_4 {dimension_numbers = #tpu.dot_dimension_numbers<[1], [0], [0], [1], [0, 0, 1, 1], [], []>} : vector<8x8xf32>, vector<8x128xf32>, vector<8x128xf32> -> vector<8x128xf32>
    %312 = vector.broadcast %5 : vector<1x128xf32> to vector<8x128xf32>
    %313 = arith.addf %311, %312 : vector<8x128xf32>
    %c0_5 = arith.constant 0 : index
    %c0_6 = arith.constant 0 : index
    %314 = vector.load %arg2[%c0_5, %c0_6] : memref<8x128xf32, #tpu.memory_space<vmem>>, vector<8x128xf32>
    tpu.vector_store %arg2[%c0_5, %c0_6], %313 {strides = array<i32>} : memref<8x128xf32, #tpu.memory_space<vmem>>, vector<8x128xf32>,
    return
  }
}

</mosaic_0001>

<llo_original>
// kernel: tpu_custom_call.1
$region0: #{tpu_custom_call.1}
  #allocation0 [shape = 'u32[]', space=smem, size = 0x4, offset = 0x4, fixed_abs, tag = 'smem constant byte address 0x4 - core index']
  #allocation1 [shape = 'u32[144,128]{1,0:T(1,128)}', space=vmem, size = 0x12000, scoped, tag = 'internal scratch']
  %s0 = inlined_call_operand.vmem [shape: f32[48,6], index: 0, kind: input, shape index: {}]
  %s1 = inlined_call_operand.vmem [shape: f32[32,128], index: 1, kind: input, shape index: {}]
  %s2 = inlined_call_operand.hbm [shape: f32[8,128], index: 2, kind: output, shape index: {}]
  %s3 = sld [smem:[#allocation0]]
  $region18: #{tpu_custom_call.1} parent=0
    _
  %s5 = ssub.s32 1, %s3
  %s6 = scalar_select 0, %s5, %s3
  $region1: #{tpu_custom_call.1} parent=0
    #allocation2 [shape = 'u8[4096]{0}', space=vmem, size = 0x1000, scoped, tag = 'output window, operand 0, single buffered']
    #allocation3 [shape = 's32[1]{0}', space=sflag, size = 0x4, scoped, tag = 'scoped memory for tpu_custom_call.1']
    %7 = vsyncpa [#allocation3], 0
    // Predicated region
    $region2: #{tpu_custom_call.1} parent=1 // pred_check
      _
    $region3: #{tpu_custom_call.1} parent=1 // pred_check_branch
      %9 = sbr.rel (0) target = $region5
    $region4: #{tpu_custom_call.1} parent=1 // pred_region
      _
    $region5: #{tpu_custom_call.1} parent=1 // pred_fallthru
      _
    // Predicated region
    $region6: #{tpu_custom_call.1} parent=1 // pred_check
      _
    $region7: #{tpu_custom_call.1} parent=1 // pred_check_branch
      %11 = sbr.rel (0) target = $region9
    $region8: #{tpu_custom_call.1} parent=1 // pred_region
      _
    $region9: #{tpu_custom_call.1} parent=1 // pred_fallthru
      _
    %v12 = vld [vmem:[%s1] sm:$0xff]
    %v13 = vld [vmem:[%s1 + $0x8] sm:$0xff]
    %v14 = vld [vmem:[%s1 + $0x10] sm:$0xff]
    %v15 = vld [vmem:[%s1 + $0x18] sm:$0xff]
    %v16 = vld [vmem:[%s0] sm:$0xff]
    %v17 = vld [vmem:[%s0 + $0x8] sm:$0xff]
    %v18 = vld [vmem:[%s0 + $0x10] sm:$0xff]
    %v19 = vld [vmem:[%s0 + $0x18] sm:$0xff]
    %v20 = vld [vmem:[%s0 + $0x20] sm:$0xff]
    %v21 = vld [vmem:[%s0 + $0x28] sm:$0xff]
    %v22 = vlaneseq
    %v23 = vshrl.u32 %v22, 7
    %v24 = vsub.s32 0, %v23
    %v25 = vrot.slane %v14, %v24
    %vm26 = vcmask 48128
    %v28 = vsel %vm26, %v16, 0
    %v31 = vsel %vm26, %v17, 0
    %v34 = vsel %vm26, %v18, 0
    %v37 = vsel %vm26, %v19, 0
    %v40 = vsel %vm26, %v20, 0
    %v43 = vsel %vm26, %v21, 0
    %vm45 = vcmask 1045504
    %v47 = vsel %vm45, %v12, 0
    %49 = vmatprep.subr.mxu0 0.0
    %50 = vmatpush1.msra.mxu0 0.0
    %51 = vmatprep.subr.mxu0 0.0
    %52 = vmatpush1.msra.mxu0 0.0
    %53 = vmatprep.subr.mxu0 0.0
    %54 = vmatpush1.msra.mxu0 0.0
    %55 = vmatprep.subr.mxu0 0.0
    %56 = vmatpush1.msra.mxu0 0.0
    %57 = vmatprep.subr.mxu0 0.0
    %58 = vmatpush1.msra.mxu0 0.0
    %59 = vmatprep.subr.mxu0 0.0
    %60 = vmatpush1.msra.mxu0 0.0
    %61 = vmatprep.subr.mxu0 0.0
    %62 = vmatpush1.msra.mxu0 0.0
    %63 = vmatprep.subr.mxu0 0.0
    %64 = vmatpush1.msra.mxu0 0.0
    %65 = vmatprep.subr.mxu0 0.0
    %66 = vmatpush1.msra.mxu0 0.0
    %67 = vmatprep.subr.mxu0 0.0
    %68 = vmatpush1.msra.mxu0 0.0
    %69 = vmatprep.subr.mxu0 0.0
    %70 = vmatpush1.msra.mxu0 0.0
    %71 = vmatprep.subr.mxu0 0.0
    %72 = vmatpush1.msra.mxu0 0.0
    %73 = vmatprep.subr.mxu0 0.0
    %74 = vmatpush1.msra.mxu0 0.0
    %75 = vmatprep.subr.mxu0 0.0
    %76 = vmatpush1.msra.mxu0 0.0
    %77 = vmatprep.subr.mxu0 0.0
    %78 = vmatpush1.msra.mxu0 0.0
    %79 = vmatprep.subr.mxu0 0.0
    %80 = vmatpush1.msra.mxu0 %v47
    %81 = vmatprep.subr.mxu0 0.0
    %82 = vmatpush2.msra.mxu0 0.0
    %83 = vmatprep.subr.mxu0 0.0
    %84 = vmatpush2.msra.mxu0 0.0
    %85 = vmatprep.subr.mxu0 0.0
    %86 = vmatpush2.msra.mxu0 0.0
    %87 = vmatprep.subr.mxu0 0.0
    %88 = vmatpush2.msra.mxu0 0.0
    %89 = vmatprep.subr.mxu0 0.0
    %90 = vmatpush2.msra.mxu0 0.0
    %91 = vmatprep.subr.mxu0 0.0
    %92 = vmatpush2.msra.mxu0 0.0
    %93 = vmatprep.subr.mxu0 0.0
    %94 = vmatpush2.msra.mxu0 0.0
    %95 = vmatprep.subr.mxu0 0.0
    %96 = vmatpush2.msra.mxu0 0.0
    %97 = vmatprep.subr.mxu0 0.0
    %98 = vmatpush2.msra.mxu0 0.0
    %99 = vmatprep.subr.mxu0 0.0
    %100 = vmatpush2.msra.mxu0 0.0
    %101 = vmatprep.subr.mxu0 0.0
    %102 = vmatpush2.msra.mxu0 0.0
    %103 = vmatprep.subr.mxu0 0.0
    %104 = vmatpush2.msra.mxu0 0.0
    %105 = vmatprep.subr.mxu0 0.0
    %106 = vmatpush2.msra.mxu0 0.0
    %107 = vmatprep.subr.mxu0 0.0
    %108 = vmatpush2.msra.mxu0 0.0
    %109 = vmatprep.subr.mxu0 0.0
    %110 = vmatpush2.msra.mxu0 0.0
    %111 = vmatprep.subr.mxu0 0.0
    %112 = vmatpush2.msra.mxu0 0.0
    %113 = vmatprep.mubr.f32.mxu0 0.0
    %114 = vmatmul.mubr.f32.gmra.mxu0 %v28
    %v115 = vpop.f32.mrf.mxu0
    %v116 = vadd.f32 %v25, %v115
    %v117 = vpop.f32.mrf.mxu0
    %118 = vmatprep.mubr.f32.mxu0 0.0
    %119 = vmatmul.mubr.f32.gmra.mxu0 %v31
    %v120 = vpop.f32.mrf.mxu0
    %v121 = vadd.f32 %v25, %v120
    %v122 = vpop.f32.mrf.mxu0
    %123 = vmatprep.mubr.f32.mxu0 0.0
    %124 = vmatmul.mubr.f32.gmra.mxu0 %v34
    %v125 = vpop.f32.mrf.mxu0
    %v126 = vadd.f32 %v25, %v125
    %v127 = vpop.f32.mrf.mxu0
    %128 = vmatprep.mubr.f32.mxu0 0.0
    %129 = vmatmul.mubr.f32.gmra.mxu0 %v37
    %v130 = vpop.f32.mrf.mxu0
    %v131 = vadd.f32 %v25, %v130
    %v132 = vpop.f32.mrf.mxu0
    %133 = vmatprep.mubr.f32.mxu0 0.0
    %134 = vmatmul.mubr.f32.gmra.mxu0 %v40
    %v135 = vpop.f32.mrf.mxu0
    %v136 = vadd.f32 %v25, %v135
    %v137 = vpop.f32.mrf.mxu0
    %138 = vmatprep.mubr.f32.mxu0 0.0
    %139 = vmatmul.mubr.f32.gmra.mxu0 %v43
    %v140 = vpop.f32.mrf.mxu0
    %v141 = vadd.f32 %v25, %v140
    %v142 = vpop.f32.mrf.mxu0
    %143 = vdwg.mxu0
    %v144 = vlaneseq
    %v145 = vshrl.u32 %v144, 7
    %v146 = vsub.s32 0, %v145
    %v147 = vrot.slane %v13, %v146
    %v148 = vmul.f32 %v147, 0.0
    %v149 = vlaneseq
    %v150 = vshrl.u32 %v149, 7
    %v151 = vsub.s32 1, %v150
    %v152 = vrot.slane %v13, %v151
    %v153 = vmul.f32 %v152, 0.0
    %v154 = vlaneseq
    %v155 = vshrl.u32 %v154, 7
    %v156 = vsub.s32 2, %v155
    %v157 = vrot.slane %v13, %v156
    %v158 = vmul.f32 %v157, 0.0
    %v159 = vlaneseq
    %v160 = vshrl.u32 %v159, 7
    %v161 = vsub.s32 3, %v160
    %v162 = vrot.slane %v13, %v161
    %v163 = vmul.f32 %v162, 0.0
    %v164 = vlaneseq
    %v165 = vshrl.u32 %v164, 7
    %v166 = vsub.s32 4, %v165
    %v167 = vrot.slane %v13, %v166
    %v168 = vmul.f32 %v167, 0.0
    %v169 = vlaneseq
    %v170 = vshrl.u32 %v169, 7
    %v171 = vsub.s32 5, %v170
    %v172 = vrot.slane %v13, %v171
    %v173 = vmul.f32 %v172, 0.0
    %v174 = vlaneseq
    %v175 = vshrl.u32 %v174, 7
    %v176 = vsub.s32 6, %v175
    %v177 = vrot.slane %v13, %v176
    %v178 = vmul.f32 %v177, 0.0
    %v179 = vlaneseq
    %v180 = vshrl.u32 %v179, 7
    %v181 = vsub.s32 7, %v180
    %v182 = vrot.slane %v13, %v181
    %v183 = vmul.f32 %v182, 0.0
    %v184 = vadd.f32 %v148, %v153
    %v185 = vadd.f32 %v158, %v163
    %v186 = vadd.f32 %v168, %v173
    %v187 = vadd.f32 %v178, %v183
    %v188 = vadd.f32 %v184, %v185
    %v189 = vadd.f32 %v186, %v187
    %v190 = vadd.f32 %v188, %v189
    %v191 = vadd.f32 %v116, %v190
    %v192 = vtanh.pop %v191
    %194 = vset.pattern.permute.xlu0 0
    %195 = vperm.xlu0 %194, %v192
    %v196 = vpop.permute.xlu0 %195
    %v198 = vmul.f32 %v196, %v147
    %199 = vset.pattern.permute.xlu0 1
    %200 = vperm.xlu0 %199, %v192
    %v201 = vpop.permute.xlu0 %200
    %v203 = vmul.f32 %v201, %v152
    %204 = vset.pattern.permute.xlu0 2
    %205 = vperm.xlu0 %204, %v192
    %v206 = vpop.permute.xlu0 %205
    %v208 = vmul.f32 %v206, %v157
    %209 = vset.pattern.permute.xlu0 3
    %210 = vperm.xlu0 %209, %v192
    %v211 = vpop.permute.xlu0 %210
    %v213 = vmul.f32 %v211, %v162
    %214 = vset.pattern.permute.xlu0 4
    %215 = vperm.xlu0 %214, %v192
    %v216 = vpop.permute.xlu0 %215
    %v218 = vmul.f32 %v216, %v167
    %219 = vset.pattern.permute.xlu0 5
    %220 = vperm.xlu0 %219, %v192
    %v221 = vpop.permute.xlu0 %220
    %v223 = vmul.f32 %v221, %v172
    %224 = vset.pattern.permute.xlu0 6
    %225 = vperm.xlu0 %224, %v192
    %v226 = vpop.permute.xlu0 %225
    %v228 = vmul.f32 %v226, %v177
    %229 = vset.pattern.permute.xlu0 7
    %230 = vperm.xlu0 %229, %v192
    %v231 = vpop.permute.xlu0 %230
    %v233 = vmul.f32 %v231, %v182
    %v234 = vadd.f32 %v198, %v203
    %v235 = vadd.f32 %v208, %v213
    %v236 = vadd.f32 %v218, %v223
    %v237 = vadd.f32 %v228, %v233
    %v238 = vadd.f32 %v234, %v235
    %v239 = vadd.f32 %v236, %v237
    %v240 = vadd.f32 %v238, %v239
    %v241 = vadd.f32 %v121, %v240
    %v242 = vtanh.pop %v241
    %244 = vset.pattern.permute.xlu0 0
    %245 = vperm.xlu0 %244, %v242
    %v246 = vpop.permute.xlu0 %245
    %v248 = vmul.f32 %v246, %v147
    %249 = vset.pattern.permute.xlu0 1
    %250 = vperm.xlu0 %249, %v242
    %v251 = vpop.permute.xlu0 %250
    %v253 = vmul.f32 %v251, %v152
    %254 = vset.pattern.permute.xlu0 2
    %255 = vperm.xlu0 %254, %v242
    %v256 = vpop.permute.xlu0 %255
    %v258 = vmul.f32 %v256, %v157
    %259 = vset.pattern.permute.xlu0 3
    %260 = vperm.xlu0 %259, %v242
    %v261 = vpop.permute.xlu0 %260
    %v263 = vmul.f32 %v261, %v162
    %264 = vset.pattern.permute.xlu0 4
    %265 = vperm.xlu0 %264, %v242
    %v266 = vpop.permute.xlu0 %265
    %v268 = vmul.f32 %v266, %v167
    %269 = vset.pattern.permute.xlu0 5
    %270 = vperm.xlu0 %269, %v242
    %v271 = vpop.permute.xlu0 %270
    %v273 = vmul.f32 %v271, %v172
    %274 = vset.pattern.permute.xlu0 6
    %275 = vperm.xlu0 %274, %v242
    %v276 = vpop.permute.xlu0 %275
    %v278 = vmul.f32 %v276, %v177
    %279 = vset.pattern.permute.xlu0 7
    %280 = vperm.xlu0 %279, %v242
    %v281 = vpop.permute.xlu0 %280
    %v283 = vmul.f32 %v281, %v182
    %v284 = vadd.f32 %v248, %v253
    %v285 = vadd.f32 %v258, %v263
    %v286 = vadd.f32 %v268, %v273
    %v287 = vadd.f32 %v278, %v283
    %v288 = vadd.f32 %v284, %v285
    %v289 = vadd.f32 %v286, %v287
    %v290 = vadd.f32 %v288, %v289
    %v291 = vadd.f32 %v126, %v290
    %v292 = vtanh.pop %v291
    %294 = vset.pattern.permute.xlu0 0
    %295 = vperm.xlu0 %294, %v292
    %v296 = vpop.permute.xlu0 %295
    %v298 = vmul.f32 %v296, %v147
    %299 = vset.pattern.permute.xlu0 1
    %300 = vperm.xlu0 %299, %v292
    %v301 = vpop.permute.xlu0 %300
    %v303 = vmul.f32 %v301, %v152
    %304 = vset.pattern.permute.xlu0 2
    %305 = vperm.xlu0 %304, %v292
    %v306 = vpop.permute.xlu0 %305
    %v308 = vmul.f32 %v306, %v157
    %309 = vset.pattern.permute.xlu0 3
    %310 = vperm.xlu0 %309, %v292
    %v311 = vpop.permute.xlu0 %310
    %v313 = vmul.f32 %v311, %v162
    %314 = vset.pattern.permute.xlu0 4
    %315 = vperm.xlu0 %314, %v292
    %v316 = vpop.permute.xlu0 %315
    %v318 = vmul.f32 %v316, %v167
    %319 = vset.pattern.permute.xlu0 5
    %320 = vperm.xlu0 %319, %v292
    %v321 = vpop.permute.xlu0 %320
    %v323 = vmul.f32 %v321, %v172
    %324 = vset.pattern.permute.xlu0 6
    %325 = vperm.xlu0 %324, %v292
    %v326 = vpop.permute.xlu0 %325
    %v328 = vmul.f32 %v326, %v177
    %329 = vset.pattern.permute.xlu0 7
    %330 = vperm.xlu0 %329, %v292
    %v331 = vpop.permute.xlu0 %330
    %v333 = vmul.f32 %v331, %v182
    %v334 = vadd.f32 %v298, %v303
    %v335 = vadd.f32 %v308, %v313
    %v336 = vadd.f32 %v318, %v323
    %v337 = vadd.f32 %v328, %v333
    %v338 = vadd.f32 %v334, %v335
    %v339 = vadd.f32 %v336, %v337
    %v340 = vadd.f32 %v338, %v339
    %v341 = vadd.f32 %v131, %v340
    %v342 = vtanh.pop %v341
    %344 = vset.pattern.permute.xlu0 0
    %345 = vperm.xlu0 %344, %v342
    %v346 = vpop.permute.xlu0 %345
    %v348 = vmul.f32 %v346, %v147
    %349 = vset.pattern.permute.xlu0 1
    %350 = vperm.xlu0 %349, %v342
    %v351 = vpop.permute.xlu0 %350
    %v353 = vmul.f32 %v351, %v152
    %354 = vset.pattern.permute.xlu0 2
    %355 = vperm.xlu0 %354, %v342
    %v356 = vpop.permute.xlu0 %355
    %v358 = vmul.f32 %v356, %v157
    %359 = vset.pattern.permute.xlu0 3
    %360 = vperm.xlu0 %359, %v342
    %v361 = vpop.permute.xlu0 %360
    %v363 = vmul.f32 %v361, %v162
    %364 = vset.pattern.permute.xlu0 4
    %365 = vperm.xlu0 %364, %v342
    %v366 = vpop.permute.xlu0 %365
    %v368 = vmul.f32 %v366, %v167
    %369 = vset.pattern.permute.xlu0 5
    %370 = vperm.xlu0 %369, %v342
    %v371 = vpop.permute.xlu0 %370
    %v373 = vmul.f32 %v371, %v172
    %374 = vset.pattern.permute.xlu0 6
    %375 = vperm.xlu0 %374, %v342
    %v376 = vpop.permute.xlu0 %375
    %v378 = vmul.f32 %v376, %v177
    %379 = vset.pattern.permute.xlu0 7
    %380 = vperm.xlu0 %379, %v342
    %v381 = vpop.permute.xlu0 %380
    %v383 = vmul.f32 %v381, %v182
    %v384 = vadd.f32 %v348, %v353
    %v385 = vadd.f32 %v358, %v363
    %v386 = vadd.f32 %v368, %v373
    %v387 = vadd.f32 %v378, %v383
    %v388 = vadd.f32 %v384, %v385
    %v389 = vadd.f32 %v386, %v387
    %v390 = vadd.f32 %v388, %v389
    %v391 = vadd.f32 %v136, %v390
    %v392 = vtanh.pop %v391
    %394 = vset.pattern.permute.xlu0 0
    %395 = vperm.xlu0 %394, %v392
    %v396 = vpop.permute.xlu0 %395
    %v398 = vmul.f32 %v396, %v147
    %399 = vset.pattern.permute.xlu0 1
    %400 = vperm.xlu0 %399, %v392
    %v401 = vpop.permute.xlu0 %400
    %v403 = vmul.f32 %v401, %v152
    %404 = vset.pattern.permute.xlu0 2
    %405 = vperm.xlu0 %404, %v392
    %v406 = vpop.permute.xlu0 %405
    %v408 = vmul.f32 %v406, %v157
    %409 = vset.pattern.permute.xlu0 3
    %410 = vperm.xlu0 %409, %v392
    %v411 = vpop.permute.xlu0 %410
    %v413 = vmul.f32 %v411, %v162
    %414 = vset.pattern.permute.xlu0 4
    %415 = vperm.xlu0 %414, %v392
    %v416 = vpop.permute.xlu0 %415
    %v418 = vmul.f32 %v416, %v167
    %419 = vset.pattern.permute.xlu0 5
    %420 = vperm.xlu0 %419, %v392
    %v421 = vpop.permute.xlu0 %420
    %v423 = vmul.f32 %v421, %v172
    %424 = vset.pattern.permute.xlu0 6
    %425 = vperm.xlu0 %424, %v392
    %v426 = vpop.permute.xlu0 %425
    %v428 = vmul.f32 %v426, %v177
    %429 = vset.pattern.permute.xlu0 7
    %430 = vperm.xlu0 %429, %v392
    %v431 = vpop.permute.xlu0 %430
    %v433 = vmul.f32 %v431, %v182
    %v434 = vadd.f32 %v398, %v403
    %v435 = vadd.f32 %v408, %v413
    %v436 = vadd.f32 %v418, %v423
    %v437 = vadd.f32 %v428, %v433
    %v438 = vadd.f32 %v434, %v435
    %v439 = vadd.f32 %v436, %v437
    %v440 = vadd.f32 %v438, %v439
    %v441 = vadd.f32 %v141, %v440
    %v442 = vtanh.pop %v441
    %v443 = vlaneseq
    %v444 = vshrl.u32 %v443, 7
    %v445 = vsub.s32 1, %v444
    %v446 = vrot.slane %v14, %v445
    %vm447 = vcmask 64512
    %v449 = vsel %vm447, %v442, 0
    %451 = vmatprep.subr.mxu0 0.0
    %452 = vmatpush1.msra.mxu0 0.0
    %453 = vmatprep.subr.mxu0 0.0
    %454 = vmatpush1.msra.mxu0 0.0
    %455 = vmatprep.subr.mxu0 0.0
    %456 = vmatpush1.msra.mxu0 0.0
    %457 = vmatprep.subr.mxu0 0.0
    %458 = vmatpush1.msra.mxu0 0.0
    %459 = vmatprep.subr.mxu0 0.0
    %460 = vmatpush1.msra.mxu0 0.0
    %461 = vmatprep.subr.mxu0 0.0
    %462 = vmatpush1.msra.mxu0 0.0
    %463 = vmatprep.subr.mxu0 0.0
    %464 = vmatpush1.msra.mxu0 0.0
    %465 = vmatprep.subr.mxu0 0.0
    %466 = vmatpush1.msra.mxu0 0.0
    %467 = vmatprep.subr.mxu0 0.0
    %468 = vmatpush1.msra.mxu0 0.0
    %469 = vmatprep.subr.mxu0 0.0
    %470 = vmatpush1.msra.mxu0 0.0
    %471 = vmatprep.subr.mxu0 0.0
    %472 = vmatpush1.msra.mxu0 0.0
    %473 = vmatprep.subr.mxu0 0.0
    %474 = vmatpush1.msra.mxu0 0.0
    %475 = vmatprep.subr.mxu0 0.0
    %476 = vmatpush1.msra.mxu0 0.0
    %477 = vmatprep.subr.mxu0 0.0
    %478 = vmatpush1.msra.mxu0 0.0
    %479 = vmatprep.subr.mxu0 0.0
    %480 = vmatpush1.msra.mxu0 0.0
    %481 = vmatprep.subr.mxu0 0.0
    %482 = vmatpush1.msra.mxu0 %v15
    %483 = vmatprep.subr.mxu0 0.0
    %484 = vmatpush2.msra.mxu0 0.0
    %485 = vmatprep.subr.mxu0 0.0
    %486 = vmatpush2.msra.mxu0 0.0
    %487 = vmatprep.subr.mxu0 0.0
    %488 = vmatpush2.msra.mxu0 0.0
    %489 = vmatprep.subr.mxu0 0.0
    %490 = vmatpush2.msra.mxu0 0.0
    %491 = vmatprep.subr.mxu0 0.0
    %492 = vmatpush2.msra.mxu0 0.0
    %493 = vmatprep.subr.mxu0 0.0
    %494 = vmatpush2.msra.mxu0 0.0
    %495 = vmatprep.subr.mxu0 0.0
    %496 = vmatpush2.msra.mxu0 0.0
    %497 = vmatprep.subr.mxu0 0.0
    %498 = vmatpush2.msra.mxu0 0.0
    %499 = vmatprep.subr.mxu0 0.0
    %500 = vmatpush2.msra.mxu0 0.0
    %501 = vmatprep.subr.mxu0 0.0
    %502 = vmatpush2.msra.mxu0 0.0
    %503 = vmatprep.subr.mxu0 0.0
    %504 = vmatpush2.msra.mxu0 0.0
    %505 = vmatprep.subr.mxu0 0.0
    %506 = vmatpush2.msra.mxu0 0.0
    %507 = vmatprep.subr.mxu0 0.0
    %508 = vmatpush2.msra.mxu0 0.0
    %509 = vmatprep.subr.mxu0 0.0
    %510 = vmatpush2.msra.mxu0 0.0
    %511 = vmatprep.subr.mxu0 0.0
    %512 = vmatpush2.msra.mxu0 0.0
    %513 = vmatprep.subr.mxu0 0.0
    %514 = vmatpush2.msra.mxu0 0.0
    %515 = vmatprep.mubr.f32.mxu0 0.0
    %516 = vmatmul.mubr.f32.gmra.mxu0 %v449
    %v517 = vpop.f32.mrf.mxu0
    %v518 = vadd.f32 %v446, %v517
    %v519 = vpop.f32.mrf.mxu0
    %520 = vdwg.mxu0
    %521 = vst [vmem:[#allocation2] sm:$0xff] %v518
    // Predicated region
    $region10: #{tpu_custom_call.1} parent=1 // pred_check
      _
    $region11: #{tpu_custom_call.1} parent=1 // pred_check_branch
      %523 = sbr.rel (0) target = $region13
    $region12: #{tpu_custom_call.1} parent=1 // pred_region
      %s525 = ssub.s32 128, 128
      %526 = vsyncadd [#allocation3], %s525
      %s528 = sshll.u32 [#allocation2], 4
      %s529 = int_to_ptr.vmem [resolvable:$true] %s528
      %531 = dma.vmem_to_hbm [thread:$0]  %s529, 128, %s2, [#allocation3]
    $region13: #{tpu_custom_call.1} parent=1 // pred_fallthru
      _
    // Predicated region
    $region14: #{tpu_custom_call.1} parent=1 // pred_check
      _
    $region15: #{tpu_custom_call.1} parent=1 // pred_check_branch
      %533 = sbr.rel (0) target = $region17
    $region16: #{tpu_custom_call.1} parent=1 // pred_region
      %534 = dma.done [#allocation3], 128
    $region17: #{tpu_custom_call.1} parent=1 // pred_fallthru
      _
    %535 = vsyncpa [#allocation3], 1

</llo_original>
